<compile_context>
chip_gen: v7x
topology: tpu7x:2x2x1
jax: 0.10.0
libtpu: 0.0.40
codegen_flags: <defaults>
</compile_context>

<pallas_src>
import functools

import jax
import jax.numpy as jnp
import numpy as np
from jax.experimental import pallas as pl
from jax.experimental.pallas import tpu as pltpu


def _mlp_kernel(S, H2,
                x_ref,               # (tb*S, D)
                wcat_ref, bcat_ref,  # [residual | fc1] : (D, H2+H1), (1, H2+H1)
                w2_ref, b2_ref,      # fc_layer_2       : (H1, H2),   (1, H2)
                wsc_ref,             # fused score vec  : (1, H2)
                wo_ref, bo_ref,      # output_layer     : (H2, H2),   (1, H2)
                wo2_ref, bo2_ref,    # output_layer_2   : (1, H2),    (1, 1)
                out_ref):            # (tb, 1)
    x = x_ref[...]                                               # (tb*S, D)
    tb = x.shape[0] // S

    # Trunk: one fused matmul produces [residual | fc1] in a single MXU push.
    xc = jnp.dot(x, wcat_ref[...],
                 preferred_element_type=jnp.float32) + bcat_ref[...]
    residual = xc[:, :H2]                                        # residual_layer(x)
    h = jnp.tanh(xc[:, H2:])                                     # tanh(fc_layer_1(x))
    h = jnp.tanh(jnp.dot(h, w2_ref[...],
                         preferred_element_type=jnp.float32) + b2_ref[...])
    out = h + residual                                           # (tb*S, H2)

    # Attention-style pooling over the sequence axis.
    out3 = out.reshape(tb, S, H2)
    wsc = wsc_ref[...].reshape(1, 1, H2)
    # Fused score head: (out @ ws1) @ ws2 == out . (ws1 @ ws2) — VPU multiply
    # + XLU lane-reduce, giving a lane-major (tb, S) score tensor.
    s = jnp.sum(out3 * wsc, axis=-1)                             # (tb, S)
    s = s - jnp.max(s, axis=-1, keepdims=True)
    e = jnp.exp(s)
    score = e * pl.reciprocal(jnp.sum(e, axis=-1, keepdims=True), approx=True)
    pooled = jnp.sum(out3 * score[:, :, None], axis=1)           # (tb, H2)

    # Output head: output_layer_2(relu(output_layer(pooled))).
    head = jnp.maximum(
        jnp.dot(pooled, wo_ref[...],
                preferred_element_type=jnp.float32) + bo_ref[...], 0.0)
    # Final (H2 -> 1) layer as multiply + lane-reduce (no N=1 MXU matmul).
    out_ref[...] = (jnp.sum(head * wo2_ref[...], axis=-1, keepdims=True)
                    + bo2_ref[...])


def _pick_batch_tile(B, S, cap=512):
    """Batch tile: whole B if small, else a divisor of B keeping blocks 8-legal."""
    if B <= cap:
        return B
    for tb in range((cap // 8) * 8, 0, -8):      # prefer multiples of 8
        if B % tb == 0:
            return tb
    for tb in range(cap, 0, -1):                 # any divisor with 8-legal rows
        if B % tb == 0 and (tb * S) % 8 == 0:
            return tb
    return B   # fallback: no tiling


def _vmem_limit_bytes(tb, S, D, H1, H2):
    f32 = 4
    nw = H1 + H2
    acts = tb * S * (D + nw + H2 + H2) * f32                  # x, xc, h, out
    weights = (D * nw + nw + H1 * H2 + H2 + H2
               + H2 * H2 + H2 + H2 + 1) * f32
    # double-buffered operands + headroom for temporaries / relayouts
    return int(min(2 * (acts + weights) + (8 << 20), 64 << 20))


def mlp_forward(x, p, *, tb=None):
    """x: (B, S, D) float32 encoder output. Returns (B, 1) float32."""
    B, S, D = x.shape
    H1 = p["w1"].shape[1]
    H2 = p["w2"].shape[1]
    nw = H2 + H1

    # ---- exact wrapper-side weight folds ----
    w_cat = jnp.concatenate([p["wr"], p["w1"]], axis=1)        # (D, H2+H1)
    b_cat = jnp.concatenate([p["br"], p["b1"]], axis=1)        # (1, H2+H1)
    w_score = (p["ws1"] @ p["ws2"]).T                          # (1, H2)
    # fused score bias is softmax-shift-invariant -> dropped exactly
    wo2_row = p["wo2"].T                                       # (1, H2)

    if tb is None:
        tb = _pick_batch_tile(B, S)
    assert B % tb == 0 and (tb == B or (tb * S) % 8 == 0)

    x2 = x.reshape(B * S, D)
    vmem = pltpu.MemorySpace.VMEM
    rep = lambda i: (0, 0)          # weights: same (resident) block every step

    grid_spec = pltpu.PrefetchScalarGridSpec(
        num_scalar_prefetch=0,
        grid=(B // tb,),
        in_specs=[
            pl.BlockSpec((tb * S, D), lambda i: (i, 0), memory_space=vmem),
            pl.BlockSpec((D, nw),  rep, memory_space=vmem),
            pl.BlockSpec((1, nw),  rep, memory_space=vmem),
            pl.BlockSpec((H1, H2), rep, memory_space=vmem),
            pl.BlockSpec((1, H2),  rep, memory_space=vmem),
            pl.BlockSpec((1, H2),  rep, memory_space=vmem),
            pl.BlockSpec((H2, H2), rep, memory_space=vmem),
            pl.BlockSpec((1, H2),  rep, memory_space=vmem),
            pl.BlockSpec((1, H2),  rep, memory_space=vmem),
            pl.BlockSpec((1, 1),   rep, memory_space=vmem),
        ],
        out_specs=pl.BlockSpec((tb, 1), lambda i: (i, 0), memory_space=vmem),
    )

    kernel = functools.partial(_mlp_kernel, S, H2)
    return pl.pallas_call(
        kernel,
        out_shape=jax.ShapeDtypeStruct((B, 1), jnp.float32),
        grid_spec=grid_spec,
        compiler_params=pltpu.CompilerParams(
            dimension_semantics=("parallel",),
            vmem_limit_bytes=_vmem_limit_bytes(tb, S, D, H1, H2),
        ),
    )(x2, w_cat, b_cat, p["w2"], p["b2"], w_score,
      p["wo"], p["bo"], wo2_row, p["bo2"])


def _reference(x, p):
    """Pure-JAX reference with the ORIGINAL (unfused) parameters."""
    res = x @ p["wr"] + p["br"][0]
    h = jnp.tanh(x @ p["w1"] + p["b1"][0])
    h = jnp.tanh(h @ p["w2"] + p["b2"][0])
    out = h + res
    s = out @ p["ws1"] + p["bs1"][0]
    s = s @ p["ws2"] + p["bs2"][0]
    score = jax.nn.softmax(s, axis=-2)
    pooled = jnp.sum(score * out, axis=-2)
    head = jax.nn.relu(pooled @ p["wo"] + p["bo"][0])
    return head @ p["wo2"] + p["bo2"][0]


def _xavier(key, fan_in, fan_out):
    std = (2.0 / (fan_in + fan_out)) ** 0.5
    return std * jax.random.normal(key, (fan_in, fan_out), jnp.float32)


def _bias(key, fan_in, fan_out):
    bound = 1.0 / (fan_in ** 0.5)
    return jax.random.uniform(key, (1, fan_out), jnp.float32, -bound, bound)


if __name__ == "__main__":
    # settings (small, consistent with the module's __init__)
    D = 32    # transformer_encoder_output_dim
    H1 = 32   # fc_layer_1_output_dim
    H2 = 32   # fc_layer_2_output_dim
    HS = 16   # score_hidden_dim
    B, S = 2, 8

    key = jax.random.PRNGKey(0)
    ks = jax.random.split(key, 16)

    params = {
        "wr":  _xavier(ks[0], D, H2),   "br":  _bias(ks[1], D, H2),
        "w1":  _xavier(ks[2], D, H1),   "b1":  _bias(ks[3], D, H1),
        "w2":  _xavier(ks[4], H1, H2),  "b2":  _bias(ks[5], H1, H2),
        "ws1": _xavier(ks[6], H2, HS),  "bs1": _bias(ks[7], H2, HS),
        "ws2": _xavier(ks[8], HS, 1),   "bs2": _bias(ks[9], HS, 1),
        "wo":  _xavier(ks[10], H2, H2), "bo":  _bias(ks[11], H2, H2),
        "wo2": _xavier(ks[12], H2, 1),  "bo2": _bias(ks[13], H2, 1),
    }

    # deterministic "encoder output" input
    x = jax.random.normal(ks[14], (B, S, D), jnp.float32)

    out = jax.block_until_ready(mlp_forward(x, params))
    ref = jax.block_until_ready(_reference(x, params))

    # pl.reciprocal(approx=True) in the softmax normalization introduces a tiny
    # (~1e-4-level) relative error vs the exact-divide reference; tolerance is
    # widened accordingly while still catching any structural mistake.
    np.testing.assert_allclose(np.asarray(out), np.asarray(ref),
                               rtol=2e-3, atol=2e-3)
    assert out.shape == (B, 1)
    print("KERNEL_OK")
</pallas_src>

<mosaic_0001>
module attributes {stable_mosaic.version = 11 : i64} {
  func.func @_mlp_kernel(%arg0: i32, %arg1: memref<16x32xf32, #tpu.memory_space<vmem>>, %arg2: memref<32x64xf32, #tpu.memory_space<vmem>>, %arg3: memref<1x64xf32, #tpu.memory_space<vmem>>, %arg4: memref<32x32xf32, #tpu.memory_space<vmem>>, %arg5: memref<1x32xf32, #tpu.memory_space<vmem>>, %arg6: memref<1x32xf32, #tpu.memory_space<vmem>>, %arg7: memref<32x32xf32, #tpu.memory_space<vmem>>, %arg8: memref<1x32xf32, #tpu.memory_space<vmem>>, %arg9: memref<1x32xf32, #tpu.memory_space<vmem>>, %arg10: memref<1x1xf32, #tpu.memory_space<vmem>>, %arg11: memref<2x1xf32, #tpu.memory_space<vmem>>) attributes {dimension_semantics = [#tpu.dimension_semantics<parallel>], iteration_bounds = array<i64: 1>, scalar_prefetch = 0 : i64, scratch_operands = 0 : i64, tpu.core_type = #tpu.core_type<tc>, window_params = [{transform_indices = @transform_0, window_bounds = array<i64: 16, 32>}, {pipeline_mode = #tpu.pipeline_mode<synchronous>, transform_indices = @transform_1, window_bounds = array<i64: 32, 64>}, {pipeline_mode = #tpu.pipeline_mode<synchronous>, transform_indices = @transform_2, window_bounds = array<i64: 1, 64>}, {pipeline_mode = #tpu.pipeline_mode<synchronous>, transform_indices = @transform_3, window_bounds = array<i64: 32, 32>}, {pipeline_mode = #tpu.pipeline_mode<synchronous>, transform_indices = @transform_4, window_bounds = array<i64: 1, 32>}, {pipeline_mode = #tpu.pipeline_mode<synchronous>, transform_indices = @transform_5, window_bounds = array<i64: 1, 32>}, {pipeline_mode = #tpu.pipeline_mode<synchronous>, transform_indices = @transform_6, window_bounds = array<i64: 32, 32>}, {pipeline_mode = #tpu.pipeline_mode<synchronous>, transform_indices = @transform_7, window_bounds = array<i64: 1, 32>}, {pipeline_mode = #tpu.pipeline_mode<synchronous>, transform_indices = @transform_8, window_bounds = array<i64: 1, 32>}, {pipeline_mode = #tpu.pipeline_mode<synchronous>, transform_indices = @transform_9, window_bounds = array<i64: 1, 1>}, {transform_indices = @transform_10, window_bounds = array<i64: 2, 1>}]} {
    %c0 = arith.constant 0 : index
    %c0_0 = arith.constant 0 : index
    %0 = vector.load %arg1[%c0, %c0_0] : memref<16x32xf32, #tpu.memory_space<vmem>>, vector<16x32xf32>
    %c0_1 = arith.constant 0 : index
    %c0_2 = arith.constant 0 : index
    %1 = vector.load %arg2[%c0_1, %c0_2] : memref<32x64xf32, #tpu.memory_space<vmem>>, vector<32x64xf32>
    %cst = arith.constant dense<0.000000e+00> : vector<16x64xf32>
    %2 = tpu.matmul %0, %1, %cst {dimension_numbers = #tpu.dot_dimension_numbers<[1], [0], [0], [1], [0, 0, 1, 1], [], []>} : vector<16x32xf32>, vector<32x64xf32>, vector<16x64xf32> -> vector<16x64xf32>
    %c0_3 = arith.constant 0 : index
    %c0_4 = arith.constant 0 : index
    %3 = vector.load %arg3[%c0_3, %c0_4] : memref<1x64xf32, #tpu.memory_space<vmem>>, vector<1x64xf32>
    %4 = vector.broadcast %3 : vector<1x64xf32> to vector<16x64xf32>
    %5 = arith.addf %2, %4 : vector<16x64xf32>
    %6 = vector.extract_strided_slice %5 {offsets = [0, 0], sizes = [16, 32], strides = [1, 1]} : vector<16x64xf32> to vector<16x32xf32>
    %7 = vector.extract_strided_slice %5 {offsets = [0, 32], sizes = [16, 32], strides = [1, 1]} : vector<16x64xf32> to vector<16x32xf32>
    %8 = math.tanh %7 : vector<16x32xf32>
    %c0_5 = arith.constant 0 : index
    %c0_6 = arith.constant 0 : index
    %9 = vector.load %arg4[%c0_5, %c0_6] : memref<32x32xf32, #tpu.memory_space<vmem>>, vector<32x32xf32>
    %cst_7 = arith.constant dense<0.000000e+00> : vector<16x32xf32>
    %10 = tpu.matmul %8, %9, %cst_7 {dimension_numbers = #tpu.dot_dimension_numbers<[1], [0], [0], [1], [0, 0, 1, 1], [], []>} : vector<16x32xf32>, vector<32x32xf32>, vector<16x32xf32> -> vector<16x32xf32>
    %c0_8 = arith.constant 0 : index
    %c0_9 = arith.constant 0 : index
    %11 = vector.load %arg5[%c0_8, %c0_9] : memref<1x32xf32, #tpu.memory_space<vmem>>, vector<1x32xf32>
    %12 = vector.broadcast %11 : vector<1x32xf32> to vector<16x32xf32>
    %13 = arith.addf %10, %12 : vector<16x32xf32>
    %14 = math.tanh %13 : vector<16x32xf32>
    %15 = arith.addf %14, %6 : vector<16x32xf32>
    %16 = vector.shape_cast %15 : vector<16x32xf32> to vector<2x8x32xf32>
    %c0_10 = arith.constant 0 : index
    %c0_11 = arith.constant 0 : index
    %17 = vector.load %arg6[%c0_10, %c0_11] : memref<1x32xf32, #tpu.memory_space<vmem>>, vector<1x32xf32>
    %18 = vector.shape_cast %17 : vector<1x32xf32> to vector<1x1x32xf32>
    %19 = vector.broadcast %18 : vector<1x1x32xf32> to vector<2x8x32xf32>
    %20 = arith.mulf %16, %19 : vector<2x8x32xf32>
    %cst_12 = arith.constant dense<0.000000e+00> : vector<2x8xf32>
    %21 = vector.multi_reduction <add>, %20, %cst_12 [2] : vector<2x8x32xf32> to vector<2x8xf32>
    %cst_13 = arith.constant dense<0xFF800000> : vector<2xf32>
    %22 = vector.multi_reduction <maximumf>, %21, %cst_13 [1] : vector<2x8xf32> to vector<2xf32>
    %23 = vector.shape_cast %22 : vector<2xf32> to vector<2x1xf32>
    %24 = vector.broadcast %23 : vector<2x1xf32> to vector<2x8xf32>
    %25 = arith.subf %21, %24 : vector<2x8xf32>
    %26 = math.exp %25 : vector<2x8xf32>
    %cst_14 = arith.constant dense<0.000000e+00> : vector<2xf32>
    %27 = vector.multi_reduction <add>, %26, %cst_14 [1] : vector<2x8xf32> to vector<2xf32>
    %28 = vector.shape_cast %27 : vector<2xf32> to vector<2x1xf32>
    %29 = tpu.reciprocal %28 {approx = true} : vector<2x1xf32> -> vector<2x1xf32>
    %30 = vector.broadcast %29 : vector<2x1xf32> to vector<2x8xf32>
    %31 = arith.mulf %26, %30 : vector<2x8xf32>
    %32 = vector.shape_cast %31 : vector<2x8xf32> to vector<2x8x1xf32>
    %33 = vector.broadcast %32 : vector<2x8x1xf32> to vector<2x8x32xf32>
    %34 = arith.mulf %16, %33 : vector<2x8x32xf32>
    %cst_15 = arith.constant dense<0.000000e+00> : vector<2x32xf32>
    %35 = vector.multi_reduction <add>, %34, %cst_15 [1] : vector<2x8x32xf32> to vector<2x32xf32>
    %c0_16 = arith.constant 0 : index
    %c0_17 = arith.constant 0 : index
    %36 = vector.load %arg7[%c0_16, %c0_17] : memref<32x32xf32, #tpu.memory_space<vmem>>, vector<32x32xf32>
    %cst_18 = arith.constant dense<0.000000e+00> : vector<2x32xf32>
    %37 = tpu.matmul %35, %36, %cst_18 {dimension_numbers = #tpu.dot_dimension_numbers<[1], [0], [0], [1], [0, 0, 1, 1], [], []>} : vector<2x32xf32>, vector<32x32xf32>, vector<2x32xf32> -> vector<2x32xf32>
    %c0_19 = arith.constant 0 : index
    %c0_20 = arith.constant 0 : index
    %38 = vector.load %arg8[%c0_19, %c0_20] : memref<1x32xf32, #tpu.memory_space<vmem>>, vector<1x32xf32>
    %39 = vector.broadcast %38 : vector<1x32xf32> to vector<2x32xf32>
    %40 = arith.addf %37, %39 : vector<2x32xf32>
    %cst_21 = arith.constant 0.000000e+00 : f32
    %41 = vector.broadcast %cst_21 : f32 to vector<2x32xf32>
    %42 = arith.maximumf %40, %41 : vector<2x32xf32>
    %c0_22 = arith.constant 0 : index
    %c0_23 = arith.constant 0 : index
    %43 = vector.load %arg9[%c0_22, %c0_23] : memref<1x32xf32, #tpu.memory_space<vmem>>, vector<1x32xf32>
    %44 = vector.broadcast %43 : vector<1x32xf32> to vector<2x32xf32>
    %45 = arith.mulf %42, %44 : vector<2x32xf32>
    %cst_24 = arith.constant dense<0.000000e+00> : vector<2xf32>
    %46 = vector.multi_reduction <add>, %45, %cst_24 [1] : vector<2x32xf32> to vector<2xf32>
    %47 = vector.shape_cast %46 : vector<2xf32> to vector<2x1xf32>
    %c0_25 = arith.constant 0 : index
    %c0_26 = arith.constant 0 : index
    %48 = vector.load %arg10[%c0_25, %c0_26] : memref<1x1xf32, #tpu.memory_space<vmem>>, vector<1x1xf32>
    %49 = vector.broadcast %48 : vector<1x1xf32> to vector<2x1xf32>
    %50 = arith.addf %47, %49 : vector<2x1xf32>
    %c0_27 = arith.constant 0 : index
    %c0_28 = arith.constant 0 : index
    %51 = vector.load %arg11[%c0_27, %c0_28] : memref<2x1xf32, #tpu.memory_space<vmem>>, vector<2x1xf32>
    tpu.vector_store %arg11[%c0_27, %c0_28], %50 {strides = array<i32>} : memref<2x1xf32, #tpu.memory_space<vmem>>, vector<2x1xf32>,
    return
  }
  func.func @transform_0(%arg0: i32) -> (i32, i32) {
    %c0_i32 = arith.constant 0 : i32
    %c0_i32_0 = arith.constant 0 : i32
    return %arg0, %c0_i32 : i32, i32
  }
  func.func @transform_1(%arg0: i32) -> (i32, i32) {
    %c0_i32 = arith.constant 0 : i32
    %c0_i32_0 = arith.constant 0 : i32
    %c0_i32_1 = arith.constant 0 : i32
    return %c0_i32, %c0_i32_0 : i32, i32
  }
  func.func @transform_2(%arg0: i32) -> (i32, i32) {
    %c0_i32 = arith.constant 0 : i32
    %c0_i32_0 = arith.constant 0 : i32
    %c0_i32_1 = arith.constant 0 : i32
    return %c0_i32, %c0_i32_0 : i32, i32
  }
  func.func @transform_3(%arg0: i32) -> (i32, i32) {
    %c0_i32 = arith.constant 0 : i32
    %c0_i32_0 = arith.constant 0 : i32
    %c0_i32_1 = arith.constant 0 : i32
    return %c0_i32, %c0_i32_0 : i32, i32
  }
  func.func @transform_4(%arg0: i32) -> (i32, i32) {
    %c0_i32 = arith.constant 0 : i32
    %c0_i32_0 = arith.constant 0 : i32
    %c0_i32_1 = arith.constant 0 : i32
    return %c0_i32, %c0_i32_0 : i32, i32
  }
  func.func @transform_5(%arg0: i32) -> (i32, i32) {
    %c0_i32 = arith.constant 0 : i32
    %c0_i32_0 = arith.constant 0 : i32
    %c0_i32_1 = arith.constant 0 : i32
    return %c0_i32, %c0_i32_0 : i32, i32
  }
  func.func @transform_6(%arg0: i32) -> (i32, i32) {
    %c0_i32 = arith.constant 0 : i32
    %c0_i32_0 = arith.constant 0 : i32
    %c0_i32_1 = arith.constant 0 : i32
    return %c0_i32, %c0_i32_0 : i32, i32
  }
  func.func @transform_7(%arg0: i32) -> (i32, i32) {
    %c0_i32 = arith.constant 0 : i32
    %c0_i32_0 = arith.constant 0 : i32
    %c0_i32_1 = arith.constant 0 : i32
    return %c0_i32, %c0_i32_0 : i32, i32
  }
  func.func @transform_8(%arg0: i32) -> (i32, i32) {
    %c0_i32 = arith.constant 0 : i32
    %c0_i32_0 = arith.constant 0 : i32
    %c0_i32_1 = arith.constant 0 : i32
    return %c0_i32, %c0_i32_0 : i32, i32
  }
  func.func @transform_9(%arg0: i32) -> (i32, i32) {
    %c0_i32 = arith.constant 0 : i32
    %c0_i32_0 = arith.constant 0 : i32
    %c0_i32_1 = arith.constant 0 : i32
    return %c0_i32, %c0_i32_0 : i32, i32
  }
  func.func @transform_10(%arg0: i32) -> (i32, i32) {
    %c0_i32 = arith.constant 0 : i32
    %c0_i32_0 = arith.constant 0 : i32
    return %arg0, %c0_i32 : i32, i32
  }
}

</mosaic_0001>

<llo_original>
// kernel: tpu_custom_call.1
$region0: #{tpu_custom_call.1}
  #allocation0 [shape = 'u32[]', space=smem, size = 0x4, offset = 0x4, fixed_abs, tag = 'smem constant byte address 0x4 - core index']
  #allocation1 [shape = 'u32[144,128]{1,0:T(1,128)}', space=vmem, size = 0x12000, scoped, tag = 'internal scratch']
  #allocation2 [shape = 'f32[1,1]{1,0:T(1,128)S(1)}', space=vmem, size = 0x200, scoped, tag = 'scoped memory for tpu_custom_call.1']
  %s0 = inlined_call_operand.hbm [shape: f32[16,32], index: 0, kind: input, shape index: {}]
  %s1 = inlined_call_operand.hbm [shape: f32[32,64], index: 1, kind: input, shape index: {}]
  %s2 = inlined_call_operand.vmem [shape: f32[1,64], index: 2, kind: input, shape index: {}]
  %s3 = inlined_call_operand.hbm [shape: f32[32,32], index: 3, kind: input, shape index: {}]
  %s4 = inlined_call_operand.vmem [shape: f32[1,32], index: 4, kind: input, shape index: {}]
  %s5 = inlined_call_operand.vmem [shape: f32[1,32], index: 5, kind: input, shape index: {}]
  %s6 = inlined_call_operand.hbm [shape: f32[32,32], index: 6, kind: input, shape index: {}]
  %s7 = inlined_call_operand.vmem [shape: f32[1,32], index: 7, kind: input, shape index: {}]
  %s8 = inlined_call_operand.vmem [shape: f32[1,32], index: 8, kind: input, shape index: {}]
  %s9 = inlined_call_operand.<no memory space> [shape: f32[1,1], index: 9, kind: input, shape index: {}]
  %s10 = inlined_call_operand.vmem [shape: f32[2,1], index: 10, kind: output, shape index: {}]
  %s11 = sld [smem:[#allocation0]]
  $region66: #{tpu_custom_call.1} parent=0
    _
  %s13 = ssub.s32 1, %s11
  %s14 = scalar_select 0, %s13, %s11
  %v15 = vstv %s9
  %16 = vst [vmem:[#allocation2] sm:$0x1] %v15
  $region1: #{tpu_custom_call.1} parent=0
    #allocation3 [shape = 'u8[8192]{0}', space=vmem, size = 0x2000, scoped, tag = 'input window, operand 0, single buffered']
    #allocation4 [shape = 's32[1]{0}', space=sflag, size = 0x4, scoped, tag = 'scoped memory for tpu_custom_call.1']
    #allocation5 [shape = 'u8[16384]{0}', space=vmem, size = 0x4000, scoped, tag = 'input window, operand 1, single buffered']
    #allocation6 [shape = 's32[1]{0}', space=sflag, size = 0x4, scoped, tag = 'scoped memory for tpu_custom_call.1']
    #allocation7 [shape = 'u8[16384]{0}', space=vmem, size = 0x4000, scoped, tag = 'input window, operand 3, single buffered']
    #allocation8 [shape = 'u8[16384]{0}', space=vmem, size = 0x4000, scoped, tag = 'input window, operand 6, single buffered']
    #allocation9 [shape = 's32[1]{0}', space=sflag, size = 0x4, scoped, tag = 'scoped memory for tpu_custom_call.1']
    %17 = vsyncpa [#allocation4], 0
    %18 = vsyncpa [#allocation6], 0
    %19 = vsyncpa [#allocation9], 0
    // Predicated region
    $region2: #{tpu_custom_call.1} parent=1 // pred_check
      _
    $region3: #{tpu_custom_call.1} parent=1 // pred_check_branch
      %21 = sbr.rel (0) target = $region5
    $region4: #{tpu_custom_call.1} parent=1 // pred_region
      %s23 = ssub.s32 256, 256
      %24 = vsyncadd [#allocation4], %s23
      %s25 = sshll.u32 [#allocation3], 4
      %s26 = int_to_ptr.vmem [resolvable:$true] %s25
      %31 = dma.hbm_to_vmem [thread:$0]  %s0, 256, %s26, [#allocation4], 128, 128, 8
    $region5: #{tpu_custom_call.1} parent=1 // pred_fallthru
      _
    // Predicated region
    $region6: #{tpu_custom_call.1} parent=1 // pred_check
      _
    $region7: #{tpu_custom_call.1} parent=1 // pred_check_branch
      %33 = sbr.rel (0) target = $region9
    $region8: #{tpu_custom_call.1} parent=1 // pred_region
      %s35 = ssub.s32 512, 512
      %36 = vsyncadd [#allocation6], %s35
      %s37 = sshll.u32 [#allocation5], 4
      %s38 = int_to_ptr.vmem [resolvable:$true] %s37
      %43 = dma.hbm_to_vmem [thread:$0]  %s1, 512, %s38, [#allocation6], 128, 128, 8
    $region9: #{tpu_custom_call.1} parent=1 // pred_fallthru
      _
    // Predicated region
    $region10: #{tpu_custom_call.1} parent=1 // pred_check
      _
    $region11: #{tpu_custom_call.1} parent=1 // pred_check_branch
      %45 = sbr.rel (0) target = $region13
    $region12: #{tpu_custom_call.1} parent=1 // pred_region
      _
    $region13: #{tpu_custom_call.1} parent=1 // pred_fallthru
      _
    // Predicated region
    $region14: #{tpu_custom_call.1} parent=1 // pred_check
      _
    $region15: #{tpu_custom_call.1} parent=1 // pred_check_branch
      %47 = sbr.rel (0) target = $region17
    $region16: #{tpu_custom_call.1} parent=1 // pred_region
      %s49 = ssub.s32 512, 512
      %50 = vsyncadd [#allocation6], %s49
      %s51 = sshll.u32 [#allocation7], 4
      %s52 = int_to_ptr.vmem [resolvable:$true] %s51
      %57 = dma.hbm_to_vmem [thread:$0]  %s3, 512, %s52, [#allocation6], 128, 128, 8
    $region17: #{tpu_custom_call.1} parent=1 // pred_fallthru
      _
    // Predicated region
    $region18: #{tpu_custom_call.1} parent=1 // pred_check
      _
    $region19: #{tpu_custom_call.1} parent=1 // pred_check_branch
      %59 = sbr.rel (0) target = $region21
    $region20: #{tpu_custom_call.1} parent=1 // pred_region
      _
    $region21: #{tpu_custom_call.1} parent=1 // pred_fallthru
      _
    // Predicated region
    $region22: #{tpu_custom_call.1} parent=1 // pred_check
      _
    $region23: #{tpu_custom_call.1} parent=1 // pred_check_branch
      %61 = sbr.rel (0) target = $region25
    $region24: #{tpu_custom_call.1} parent=1 // pred_region
      _
    $region25: #{tpu_custom_call.1} parent=1 // pred_fallthru
      _
    // Predicated region
    $region26: #{tpu_custom_call.1} parent=1 // pred_check
      _
    $region27: #{tpu_custom_call.1} parent=1 // pred_check_branch
      %63 = sbr.rel (0) target = $region29
    $region28: #{tpu_custom_call.1} parent=1 // pred_region
      %s65 = ssub.s32 512, 512
      %66 = vsyncadd [#allocation9], %s65
      %s67 = sshll.u32 [#allocation8], 4
      %s68 = int_to_ptr.vmem [resolvable:$true] %s67
      %73 = dma.hbm_to_vmem [thread:$0]  %s6, 512, %s68, [#allocation9], 128, 128, 8
    $region29: #{tpu_custom_call.1} parent=1 // pred_fallthru
      _
    // Predicated region
    $region30: #{tpu_custom_call.1} parent=1 // pred_check
      _
    $region31: #{tpu_custom_call.1} parent=1 // pred_check_branch
      %75 = sbr.rel (0) target = $region33
    $region32: #{tpu_custom_call.1} parent=1 // pred_region
      _
    $region33: #{tpu_custom_call.1} parent=1 // pred_fallthru
      _
    // Predicated region
    $region34: #{tpu_custom_call.1} parent=1 // pred_check
      _
    $region35: #{tpu_custom_call.1} parent=1 // pred_check_branch
      %77 = sbr.rel (0) target = $region37
    $region36: #{tpu_custom_call.1} parent=1 // pred_region
      _
    $region37: #{tpu_custom_call.1} parent=1 // pred_fallthru
      _
    // Predicated region
    $region38: #{tpu_custom_call.1} parent=1 // pred_check
      _
    $region39: #{tpu_custom_call.1} parent=1 // pred_check_branch
      %79 = sbr.rel (0) target = $region41
    $region40: #{tpu_custom_call.1} parent=1 // pred_region
      _
    $region41: #{tpu_custom_call.1} parent=1 // pred_fallthru
      _
    // Predicated region
    $region42: #{tpu_custom_call.1} parent=1 // pred_check
      _
    $region43: #{tpu_custom_call.1} parent=1 // pred_check_branch
      %81 = sbr.rel (0) target = $region45
    $region44: #{tpu_custom_call.1} parent=1 // pred_region
      %82 = dma.done [#allocation4], 256
    $region45: #{tpu_custom_call.1} parent=1 // pred_fallthru
      _
    // Predicated region
    $region46: #{tpu_custom_call.1} parent=1 // pred_check
      _
    $region47: #{tpu_custom_call.1} parent=1 // pred_check_branch
      %84 = sbr.rel (0) target = $region49
    $region48: #{tpu_custom_call.1} parent=1 // pred_region
      %85 = dma.done [#allocation6], 512
    $region49: #{tpu_custom_call.1} parent=1 // pred_fallthru
      _
    // Predicated region
    $region50: #{tpu_custom_call.1} parent=1 // pred_check
      _
    $region51: #{tpu_custom_call.1} parent=1 // pred_check_branch
      %87 = sbr.rel (0) target = $region53
    $region52: #{tpu_custom_call.1} parent=1 // pred_region
      %88 = dma.done [#allocation6], 512
    $region53: #{tpu_custom_call.1} parent=1 // pred_fallthru
      _
    // Predicated region
    $region54: #{tpu_custom_call.1} parent=1 // pred_check
      _
    $region55: #{tpu_custom_call.1} parent=1 // pred_check_branch
      %90 = sbr.rel (0) target = $region57
    $region56: #{tpu_custom_call.1} parent=1 // pred_region
      %91 = dma.done [#allocation9], 512
    $region57: #{tpu_custom_call.1} parent=1 // pred_fallthru
      _
    %v92 = vld [vmem:[#allocation3] sm:$0xff]
    %v93 = vld [vmem:[#allocation3 + $0x8] sm:$0xff]
    %v94 = vld [vmem:[#allocation5] sm:$0xff]
    %v95 = vld [vmem:[#allocation5 + $0x8] sm:$0xff]
    %v96 = vld [vmem:[#allocation5 + $0x10] sm:$0xff]
    %v97 = vld [vmem:[#allocation5 + $0x18] sm:$0xff]
    %v98 = vld [vmem:[%s2] sm:$0x1]
    %v100 = vlaneseq
    %v101 = vshrl.u32 %v100, 7
    %v102 = vsub.s32 0, %v101
    %v103 = vrot.slane %v98, %v102
    %vm105 = vcmask 261120
    %v107 = vsel %vm105, %v92, 0
    %v110 = vsel %vm105, %v93, 0
    %112 = vmatprep.subr.mxu0 0.0
    %113 = vmatpush1.msra.mxu0 %v94
    %114 = vmatprep.subr.mxu0 0.0
    %115 = vmatpush1.msra.mxu0 %v95
    %116 = vmatprep.subr.mxu0 0.0
    %117 = vmatpush1.msra.mxu0 %v96
    %118 = vmatprep.subr.mxu0 0.0
    %119 = vmatpush1.msra.mxu0 %v97
    %120 = vmatprep.subr.mxu0 0.0
    %121 = vmatpush1.msra.mxu0 0.0
    %122 = vmatprep.subr.mxu0 0.0
    %123 = vmatpush1.msra.mxu0 0.0
    %124 = vmatprep.subr.mxu0 0.0
    %125 = vmatpush1.msra.mxu0 0.0
    %126 = vmatprep.subr.mxu0 0.0
    %127 = vmatpush1.msra.mxu0 0.0
    %128 = vmatprep.subr.mxu0 0.0
    %129 = vmatpush1.msra.mxu0 0.0
    %130 = vmatprep.subr.mxu0 0.0
    %131 = vmatpush1.msra.mxu0 0.0
    %132 = vmatprep.subr.mxu0 0.0
    %133 = vmatpush1.msra.mxu0 0.0
    %134 = vmatprep.subr.mxu0 0.0
    %135 = vmatpush1.msra.mxu0 0.0
    %136 = vmatprep.subr.mxu0 0.0
    %137 = vmatpush1.msra.mxu0 0.0
    %138 = vmatprep.subr.mxu0 0.0
    %139 = vmatpush1.msra.mxu0 0.0
    %140 = vmatprep.subr.mxu0 0.0
    %141 = vmatpush1.msra.mxu0 0.0
    %142 = vmatprep.subr.mxu0 0.0
    %143 = vmatpush1.msra.mxu0 0.0
    %144 = vmatprep.subr.mxu0 0.0
    %145 = vmatpush1.msra.mxu0 0.0
    %146 = vmatprep.subr.mxu0 0.0
    %147 = vmatpush1.msra.mxu0 0.0
    %148 = vmatprep.subr.mxu0 0.0
    %149 = vmatpush1.msra.mxu0 0.0
    %150 = vmatprep.subr.mxu0 0.0
    %151 = vmatpush1.msra.mxu0 0.0
    %152 = vmatprep.subr.mxu0 0.0
    %153 = vmatpush1.msra.mxu0 0.0
    %154 = vmatprep.subr.mxu0 0.0
    %155 = vmatpush1.msra.mxu0 0.0
    %156 = vmatprep.subr.mxu0 0.0
    %157 = vmatpush1.msra.mxu0 0.0
    %158 = vmatprep.subr.mxu0 0.0
    %159 = vmatpush1.msra.mxu0 0.0
    %160 = vmatprep.subr.mxu0 0.0
    %161 = vmatpush1.msra.mxu0 0.0
    %162 = vmatprep.subr.mxu0 0.0
    %163 = vmatpush1.msra.mxu0 0.0
    %164 = vmatprep.subr.mxu0 0.0
    %165 = vmatpush1.msra.mxu0 0.0
    %166 = vmatprep.subr.mxu0 0.0
    %167 = vmatpush1.msra.mxu0 0.0
    %168 = vmatprep.subr.mxu0 0.0
    %169 = vmatpush1.msra.mxu0 0.0
    %170 = vmatprep.subr.mxu0 0.0
    %171 = vmatpush1.msra.mxu0 0.0
    %172 = vmatprep.subr.mxu0 0.0
    %173 = vmatpush1.msra.mxu0 0.0
    %174 = vmatprep.subr.mxu0 0.0
    %175 = vmatpush1.msra.mxu0 0.0
    %176 = vmatprep.mubr.f32.mxu0 0.0
    %177 = vmatmul.mubr.f32.gmra.mrb[0].mxu0 %v107
    %v178 = vpop.f32.mrb[0].mxu0
    %v179 = vadd.f32 %v103, %v178
    %v180 = vpop.f32.mrb[0].mxu0
    %181 = vmatprep.mubr.f32.mxu0 0.0
    %182 = vmatmul.mubr.f32.gmra.mrb[0].mxu0 %v110
    %v183 = vpop.f32.mrb[0].mxu0
    %v184 = vadd.f32 %v103, %v183
    %v185 = vpop.f32.mrb[0].mxu0
    %186 = vdwg.mxu0
    %v187 = vtanh.pop %v179
    %v188 = vtanh.pop %v184
    %v189 = vld [vmem:[#allocation7] sm:$0xff]
    %v190 = vld [vmem:[#allocation7 + $0x8] sm:$0xff]
    %v191 = vld [vmem:[#allocation7 + $0x10] sm:$0xff]
    %v192 = vld [vmem:[#allocation7 + $0x18] sm:$0xff]
    %v193 = vld [vmem:[%s4] sm:$0x1]
    %v195 = vlaneseq
    %v196 = vshrl.u32 %v195, 7
    %v197 = vsub.s32 0, %v196
    %v198 = vrot.slane %v193, %v197
    %202 = vrot.lane.b32.xlu0 %v187, 96
    %v203 = vpop.permute.xlu0 %202
    %204 = vrot.lane.b32.xlu0 %v188, 96
    %v205 = vpop.permute.xlu0 %204
    %v206 = vsel %vm105, %v203, 0
    %v208 = vsel %vm105, %v205, 0
    %210 = vmatprep.subr.mxu0 0.0
    %211 = vmatpush1.msra.mxu0 %v189
    %212 = vmatprep.subr.mxu0 0.0
    %213 = vmatpush1.msra.mxu0 %v190
    %214 = vmatprep.subr.mxu0 0.0
    %215 = vmatpush1.msra.mxu0 %v191
    %216 = vmatprep.subr.mxu0 0.0
    %217 = vmatpush1.msra.mxu0 %v192
    %218 = vmatprep.subr.mxu0 0.0
    %219 = vmatpush1.msra.mxu0 0.0
    %220 = vmatprep.subr.mxu0 0.0
    %221 = vmatpush1.msra.mxu0 0.0
    %222 = vmatprep.subr.mxu0 0.0
    %223 = vmatpush1.msra.mxu0 0.0
    %224 = vmatprep.subr.mxu0 0.0
    %225 = vmatpush1.msra.mxu0 0.0
    %226 = vmatprep.subr.mxu0 0.0
    %227 = vmatpush1.msra.mxu0 0.0
    %228 = vmatprep.subr.mxu0 0.0
    %229 = vmatpush1.msra.mxu0 0.0
    %230 = vmatprep.subr.mxu0 0.0
    %231 = vmatpush1.msra.mxu0 0.0
    %232 = vmatprep.subr.mxu0 0.0
    %233 = vmatpush1.msra.mxu0 0.0
    %234 = vmatprep.subr.mxu0 0.0
    %235 = vmatpush1.msra.mxu0 0.0
    %236 = vmatprep.subr.mxu0 0.0
    %237 = vmatpush1.msra.mxu0 0.0
    %238 = vmatprep.subr.mxu0 0.0
    %239 = vmatpush1.msra.mxu0 0.0
    %240 = vmatprep.subr.mxu0 0.0
    %241 = vmatpush1.msra.mxu0 0.0
    %242 = vmatprep.subr.mxu0 0.0
    %243 = vmatpush1.msra.mxu0 0.0
    %244 = vmatprep.subr.mxu0 0.0
    %245 = vmatpush1.msra.mxu0 0.0
    %246 = vmatprep.subr.mxu0 0.0
    %247 = vmatpush1.msra.mxu0 0.0
    %248 = vmatprep.subr.mxu0 0.0
    %249 = vmatpush1.msra.mxu0 0.0
    %250 = vmatprep.subr.mxu0 0.0
    %251 = vmatpush1.msra.mxu0 0.0
    %252 = vmatprep.subr.mxu0 0.0
    %253 = vmatpush1.msra.mxu0 0.0
    %254 = vmatprep.subr.mxu0 0.0
    %255 = vmatpush1.msra.mxu0 0.0
    %256 = vmatprep.subr.mxu0 0.0
    %257 = vmatpush1.msra.mxu0 0.0
    %258 = vmatprep.subr.mxu0 0.0
    %259 = vmatpush1.msra.mxu0 0.0
    %260 = vmatprep.subr.mxu0 0.0
    %261 = vmatpush1.msra.mxu0 0.0
    %262 = vmatprep.subr.mxu0 0.0
    %263 = vmatpush1.msra.mxu0 0.0
    %264 = vmatprep.subr.mxu0 0.0
    %265 = vmatpush1.msra.mxu0 0.0
    %266 = vmatprep.subr.mxu0 0.0
    %267 = vmatpush1.msra.mxu0 0.0
    %268 = vmatprep.subr.mxu0 0.0
    %269 = vmatpush1.msra.mxu0 0.0
    %270 = vmatprep.subr.mxu0 0.0
    %271 = vmatpush1.msra.mxu0 0.0
    %272 = vmatprep.subr.mxu0 0.0
    %273 = vmatpush1.msra.mxu0 0.0
    %274 = vmatprep.mubr.f32.mxu0 0.0
    %275 = vmatmul.mubr.f32.gmra.mrb[0].mxu0 %v206
    %v276 = vpop.f32.mrb[0].mxu0
    %v277 = vadd.f32 %v198, %v276
    %v278 = vpop.f32.mrb[0].mxu0
    %279 = vmatprep.mubr.f32.mxu0 0.0
    %280 = vmatmul.mubr.f32.gmra.mrb[0].mxu0 %v208
    %v281 = vpop.f32.mrb[0].mxu0
    %v282 = vadd.f32 %v198, %v281
    %v283 = vpop.f32.mrb[0].mxu0
    %284 = vdwg.mxu0
    %v285 = vtanh.pop %v277
    %v286 = vtanh.pop %v282
    %v287 = vadd.f32 %v285, %v179
    %v288 = vadd.f32 %v286, %v184
    %v289 = vld [vmem:[%s5] sm:$0x1]
    %v291 = vlaneseq
    %v292 = vshrl.u32 %v291, 7
    %v293 = vsub.s32 0, %v292
    %v294 = vrot.slane %v289, %v293
    %v296 = vmul.f32 %v287, %v294
    %v297 = vmul.f32 %v288, %v294
    %v298 = vsel %vm105, %v296, 0.0
    %299 = vadd.xlane.f32.xlu0 %v298
    %v300 = vpop.xlane.xlu0 %299
    %v301 = vsel %vm105, %v297, 0.0
    %302 = vadd.xlane.f32.xlu0 %v301
    %v303 = vpop.xlane.xlu0 %302
    %v306 = vlaneseq
    %v307 = vand.u32 %v306, 127
    %v308 = vlaneseq
    %v309 = vshrl.u32 %v308, 7
    %v310 = vsub.s32 %v307, %v309
    %v311 = vrot.slane %v300, %v310
    %v312 = vlaneseq
    %v313 = vshrl.u32 %v312, 7
    %v314 = vsub.s32 %v307, %v313
    %v315 = vrot.slane %v303, %v314
    %vm316 = vcmask 1041409
    %v317 = vsel %vm316, %v315, %v311
    %vm319 = vcmask 58368
    %v320 = vsel %vm319, %v317, -inf
    %321 = vmax.xlane.f32.xlu0 %v320
    %v322 = vpop.xlane.xlu0 %321
    %v324 = vlaneseq
    %v325 = vshrl.u32 %v324, 7
    %v326 = vsub.s32 0, %v325
    %v327 = vrot.slane %v322, %v326
    %v328 = vlaneseq
    %v329 = vshrl.u32 %v328, 7
    %v330 = vsub.s32 1, %v329
    %v331 = vrot.slane %v322, %v330
    %v334 = vsub.f32 %v300, %v327
    %v335 = vsub.f32 %v303, %v331
    %v336 = vmul.f32 %v334, 1.442695
    %v337 = vpow.pop %v336
    %v338 = vmul.f32 %v335, 1.442695
    %v339 = vpow.pop %v338
    %342 = vset.pattern.permute.xlu0 0
    %343 = vperm.xlu0 %342, %v337
    %v344 = vpop.permute.xlu0 %343
    %345 = vset.pattern.permute.xlu0 0
    %346 = vperm.xlu0 %345, %v339
    %v347 = vpop.permute.xlu0 %346
    %v348 = vlaneseq
    %v349 = vshrl.u32 %v348, 7
    %v350 = vsub.s32 %v307, %v349
    %v351 = vrot.slane %v344, %v350
    %v352 = vlaneseq
    %v353 = vshrl.u32 %v352, 7
    %v354 = vsub.s32 %v307, %v353
    %v355 = vrot.slane %v347, %v354
    %v356 = vsel %vm316, %v355, %v351
    %v358 = vsel %vm319, %v356, 0.0
    %359 = vadd.xlane.f32.xlu0 %v358
    %v360 = vpop.xlane.xlu0 %359
    %v361 = vrcp.pop %v360
    %v363 = vlaneseq
    %v364 = vshrl.u32 %v363, 7
    %v365 = vsub.s32 0, %v364
    %v366 = vrot.slane %v361, %v365
    %v367 = vlaneseq
    %v368 = vshrl.u32 %v367, 7
    %v369 = vsub.s32 1, %v368
    %v370 = vrot.slane %v361, %v369
    %v373 = vmul.f32 %v337, %v366
    %v374 = vmul.f32 %v339, %v370
    %376 = vset.pattern.permute.xlu0 0
    %377 = vperm.xlu0 %376, %v373
    %v378 = vpop.permute.xlu0 %377
    %381 = vset.pattern.permute.xlu0 0
    %382 = vperm.xlu0 %381, %v374
    %v383 = vpop.permute.xlu0 %382
    %v385 = vmul.f32 %v287, %v378
    %v386 = vmul.f32 %v288, %v383
    %v387 = vsel %vm105, %v385, 0.0
    %v388 = vrot.slane %v387, 4
    %v389 = vadd.f32 %v387, %v388
    %v390 = vrot.slane %v389, 2
    %v391 = vadd.f32 %v389, %v390
    %v392 = vrot.slane %v391, 1
    %v393 = vadd.f32 %v391, %v392
    %v394 = vsel %vm105, %v386, 0.0
    %v395 = vrot.slane %v394, 4
    %v396 = vadd.f32 %v394, %v395
    %v397 = vrot.slane %v396, 2
    %v398 = vadd.f32 %v396, %v397
    %v399 = vrot.slane %v398, 1
    %v400 = vadd.f32 %v398, %v399
    %v401 = vld [vmem:[#allocation8] sm:$0xff]
    %v402 = vld [vmem:[#allocation8 + $0x8] sm:$0xff]
    %v403 = vld [vmem:[#allocation8 + $0x10] sm:$0xff]
    %v404 = vld [vmem:[#allocation8 + $0x18] sm:$0xff]
    %v405 = vld [vmem:[%s7] sm:$0x1]
    %v407 = vlaneseq
    %v408 = vshrl.u32 %v407, 7
    %v409 = vsub.s32 0, %v408
    %v410 = vrot.slane %v405, %v409
    %v414 = vsel %vm316, %v400, %v393
    %v415 = vsel %vm105, %v414, 0
    %417 = vmatprep.subr.mxu0 0.0
    %418 = vmatpush1.msra.mxu0 %v401
    %419 = vmatprep.subr.mxu0 0.0
    %420 = vmatpush1.msra.mxu0 %v402
    %421 = vmatprep.subr.mxu0 0.0
    %422 = vmatpush1.msra.mxu0 %v403
    %423 = vmatprep.subr.mxu0 0.0
    %424 = vmatpush1.msra.mxu0 %v404
    %425 = vmatprep.subr.mxu0 0.0
    %426 = vmatpush1.msra.mxu0 0.0
    %427 = vmatprep.subr.mxu0 0.0
    %428 = vmatpush1.msra.mxu0 0.0
    %429 = vmatprep.subr.mxu0 0.0
    %430 = vmatpush1.msra.mxu0 0.0
    %431 = vmatprep.subr.mxu0 0.0
    %432 = vmatpush1.msra.mxu0 0.0
    %433 = vmatprep.subr.mxu0 0.0
    %434 = vmatpush1.msra.mxu0 0.0
    %435 = vmatprep.subr.mxu0 0.0
    %436 = vmatpush1.msra.mxu0 0.0
    %437 = vmatprep.subr.mxu0 0.0
    %438 = vmatpush1.msra.mxu0 0.0
    %439 = vmatprep.subr.mxu0 0.0
    %440 = vmatpush1.msra.mxu0 0.0
    %441 = vmatprep.subr.mxu0 0.0
    %442 = vmatpush1.msra.mxu0 0.0
    %443 = vmatprep.subr.mxu0 0.0
    %444 = vmatpush1.msra.mxu0 0.0
    %445 = vmatprep.subr.mxu0 0.0
    %446 = vmatpush1.msra.mxu0 0.0
    %447 = vmatprep.subr.mxu0 0.0
    %448 = vmatpush1.msra.mxu0 0.0
    %449 = vmatprep.subr.mxu0 0.0
    %450 = vmatpush1.msra.mxu0 0.0
    %451 = vmatprep.subr.mxu0 0.0
    %452 = vmatpush1.msra.mxu0 0.0
    %453 = vmatprep.subr.mxu0 0.0
    %454 = vmatpush1.msra.mxu0 0.0
    %455 = vmatprep.subr.mxu0 0.0
    %456 = vmatpush1.msra.mxu0 0.0
    %457 = vmatprep.subr.mxu0 0.0
    %458 = vmatpush1.msra.mxu0 0.0
    %459 = vmatprep.subr.mxu0 0.0
    %460 = vmatpush1.msra.mxu0 0.0
    %461 = vmatprep.subr.mxu0 0.0
    %462 = vmatpush1.msra.mxu0 0.0
    %463 = vmatprep.subr.mxu0 0.0
    %464 = vmatpush1.msra.mxu0 0.0
    %465 = vmatprep.subr.mxu0 0.0
    %466 = vmatpush1.msra.mxu0 0.0
    %467 = vmatprep.subr.mxu0 0.0
    %468 = vmatpush1.msra.mxu0 0.0
    %469 = vmatprep.subr.mxu0 0.0
    %470 = vmatpush1.msra.mxu0 0.0
    %471 = vmatprep.subr.mxu0 0.0
    %472 = vmatpush1.msra.mxu0 0.0
    %473 = vmatprep.subr.mxu0 0.0
    %474 = vmatpush1.msra.mxu0 0.0
    %475 = vmatprep.subr.mxu0 0.0
    %476 = vmatpush1.msra.mxu0 0.0
    %477 = vmatprep.subr.mxu0 0.0
    %478 = vmatpush1.msra.mxu0 0.0
    %479 = vmatprep.subr.mxu0 0.0
    %480 = vmatpush1.msra.mxu0 0.0
    %481 = vmatprep.mubr.f32.mxu0 0.0
    %482 = vmatmul.mubr.f32.gmra.mrb[0].mxu0 %v415
    %v483 = vpop.f32.mrb[0].mxu0
    %v484 = vadd.f32 %v410, %v483
    %v485 = vpop.f32.mrb[0].mxu0
    %486 = vdwg.mxu0
    %v487 = vmax.f32 %v484, 0.0
    %v488 = vld [vmem:[%s8] sm:$0x1]
    %v490 = vlaneseq
    %v491 = vshrl.u32 %v490, 7
    %v492 = vsub.s32 0, %v491
    %v493 = vrot.slane %v488, %v492
    %v495 = vmul.f32 %v487, %v493
    %vm496 = vcmask 254976
    %v497 = vsel %vm496, %v495, 0.0
    %498 = vadd.xlane.f32.xlu0 %v497
    %v499 = vpop.xlane.xlu0 %498
    %v500 = vld [vmem:[#allocation2] sm:$0x1]
    %v502 = vlaneseq
    %v503 = vshrl.u32 %v502, 7
    %v504 = vsub.s32 0, %v503
    %v505 = vrot.slane %v500, %v504
    %v507 = vadd.f32 %v499, %v505
    %vm508 = vcmask 1024
    %509 = vst.msk [vmem:[%s10] sm:$0x3] %vm508, %v507
    // Predicated region
    $region58: #{tpu_custom_call.1} parent=1 // pred_check
      _
    $region59: #{tpu_custom_call.1} parent=1 // pred_check_branch
      %511 = sbr.rel (0) target = $region61
    $region60: #{tpu_custom_call.1} parent=1 // pred_region
      _
    $region61: #{tpu_custom_call.1} parent=1 // pred_fallthru
      _
    // Predicated region
    $region62: #{tpu_custom_call.1} parent=1 // pred_check
      _
    $region63: #{tpu_custom_call.1} parent=1 // pred_check_branch
      %513 = sbr.rel (0) target = $region65
    $region64: #{tpu_custom_call.1} parent=1 // pred_region
      _
    $region65: #{tpu_custom_call.1} parent=1 // pred_fallthru
      _
    %514 = vsyncpa [#allocation4], 1
    %515 = vsyncpa [#allocation6], 1
    %516 = vsyncpa [#allocation9], 1

</llo_original>
